<compile_context>
chip_gen: v6e
topology: v6e:2x2x1
jax: 0.10.0
libtpu: 0.0.40
codegen_flags: <defaults>
</compile_context>

<pallas_src>
import math

import jax
import jax.numpy as jnp
from jax.experimental import pallas as pl
from jax.experimental.pallas import tpu as pltpu


_LANE = 128
_SUBLANE = 8
_TILE_BUDGET_BYTES = 6 * 1024 * 1024    # per-array, per-block
_VMEM_LIMIT_BYTES = 40 * 1024 * 1024    # 2 arrays x 2 buffers x 6 MiB + headroom


def _round_up(v, m):
    return (v + m - 1) // m * m


def _sublane_multiple(dtype):
    itemsize = jnp.dtype(dtype).itemsize
    if itemsize >= 4:
        return _SUBLANE
    return _SUBLANE * (4 // itemsize)    # bf16/f16 -> 16, int8/fp8 -> 32


def _drop_path_kernel(scale_ref, x_ref, o_ref):
    # scale_ref: (tile_n, 1) float32 per-sample scale = keep_mask / keep_prob
    # x_ref / o_ref: (tile_n, tile_l) lane-dense activation tile
    # Multiply in float32 (bf16/f16 promote automatically); cast only the product.
    o_ref[...] = (x_ref[...] * scale_ref[...]).astype(o_ref.dtype)


def drop_path_pallas(x, drop_prob: float, training: bool, key, *, donate_x: bool = False):
    """Stochastic depth, matching torch drop_path semantics:
         out = x / keep_prob * floor(keep_prob + U[0,1))   (per sample)
    Returns (out, keep_mask) on every path.
    """
    n = x.shape[0]
    if drop_prob == 0.0 or not training:
        return x, jnp.ones((n,), dtype=jnp.float32)
    if drop_prob >= 1.0:
        # keep_prob == 0 would give 0 * inf = NaN; every sample is dropped.
        return jnp.zeros_like(x), jnp.zeros((n,), dtype=jnp.float32)

    keep_prob = 1.0 - drop_prob

    # Per-sample keep mask / scale in float32 (tiny glue; RNG done in plain JAX).
    u = jax.random.uniform(key, (n,), dtype=jnp.float32)
    mask = jnp.floor(keep_prob + u)              # {0., 1.}
    scale = mask * (1.0 / keep_prob)             # per-sample scale, kept in f32

    orig_shape = x.shape
    itemsize = jnp.dtype(x.dtype).itemsize
    l = math.prod(x.shape[1:]) if x.ndim > 1 else 1

    sub = _sublane_multiple(x.dtype)
    l128 = _round_up(max(l, 1), _LANE)
    budget_rows = _TILE_BUDGET_BYTES // (l128 * itemsize)

    if budget_rows >= sub:
        # Whole flattened sample fits in one lane block: cover L with a single
        # block and fill the byte budget with rows (amortizes per-step overhead).
        tile_l = l128
        tile_n = min(_round_up(n, sub), budget_rows // sub * sub)
        if n > sub:
            # Only one lane block -> keep >= 2 row blocks so both v7x TCs get work.
            tile_n = min(tile_n, _round_up(pl.cdiv(n, 2), sub))
        tile_n = max(tile_n, sub)
    else:
        # Long samples: minimal row tile, split L into near-equal 128-aligned
        # chunks within the byte budget (edge waste < 128 lanes per chunk).
        tile_n = sub
        max_tile_l = max(
            _LANE, (_TILE_BUDGET_BYTES // (tile_n * itemsize)) // _LANE * _LANE)
        num_l = pl.cdiv(l128, max_tile_l)
        tile_l = _round_up(pl.cdiv(l128, num_l), _LANE)

    x2 = x.reshape(n, l)            # free: collapses trailing dims, lane-dense
    scale2 = scale.reshape(n, 1)

    grid = (pl.cdiv(n, tile_n), pl.cdiv(l, tile_l))   # ragged edges masked by Pallas

    out = pl.pallas_call(
        _drop_path_kernel,
        out_shape=jax.ShapeDtypeStruct((n, l), x.dtype),
        grid_spec=pltpu.PrefetchScalarGridSpec(
            num_scalar_prefetch=0,
            grid=grid,
            in_specs=[
                pl.BlockSpec((tile_n, 1), lambda i, j: (i, 0)),       # per-row scale
                pl.BlockSpec((tile_n, tile_l), lambda i, j: (i, j)),  # x tile
            ],
            out_specs=pl.BlockSpec((tile_n, tile_l), lambda i, j: (i, j)),
        ),
        compiler_params=pltpu.CompilerParams(
            dimension_semantics=("parallel", "parallel"),
            vmem_limit_bytes=_VMEM_LIMIT_BYTES,
        ),
        # Only donate when the caller no longer needs x (halves peak HBM footprint).
        input_output_aliases=({1: 0} if donate_x else {}),
    )(scale2, x2)

    return out.reshape(orig_shape), mask


if __name__ == "__main__":
    key = jax.random.PRNGKey(0)
    kx, kmask, kx2, kmask2, kx3, kmask3, kx4, kmask4 = jax.random.split(key, 8)

    drop_prob = 0.25
    keep_prob = 1.0 - drop_prob

    # Small NCHW input consistent with typical DropPath usage.
    N, C, H, W = 2, 4, 16, 16
    x = jax.random.normal(kx, (N, C, H, W), dtype=jnp.float32)
    out, mask = drop_path_pallas(x, drop_prob=drop_prob, training=True, key=kmask)
    out = jax.block_until_ready(out)
    ref = x * (mask / keep_prob).reshape(N, 1, 1, 1).astype(x.dtype)
    assert out.shape == x.shape and out.dtype == x.dtype
    assert jnp.allclose(out, ref, atol=1e-6, rtol=1e-6)

    # Non-divisible shape exercises the masked-edge path (N not %8, CHW not %128).
    x_odd = jax.random.normal(kx2, (3, 5, 7, 9), dtype=jnp.float32)
    out_odd, mask_odd = drop_path_pallas(x_odd, drop_prob=drop_prob,
                                         training=True, key=kmask2)
    out_odd = jax.block_until_ready(out_odd)
    ref_odd = x_odd * (mask_odd / keep_prob).reshape(3, 1, 1, 1).astype(x_odd.dtype)
    assert out_odd.shape == x_odd.shape
    assert jnp.allclose(out_odd, ref_odd, atol=1e-6, rtol=1e-6)

    # Multi-row-block path (n=20 -> 2 row blocks, partial edge block).
    x_rows = jax.random.normal(kx3, (20, 4, 8, 8), dtype=jnp.float32)
    out_rows, mask_rows = drop_path_pallas(x_rows, drop_prob=drop_prob,
                                           training=True, key=kmask3)
    out_rows = jax.block_until_ready(out_rows)
    ref_rows = x_rows * (mask_rows / keep_prob).reshape(20, 1, 1, 1).astype(x_rows.dtype)
    assert jnp.allclose(out_rows, ref_rows, atol=1e-6, rtol=1e-6)

    # bf16 path: dtype-aware sublane tile, scale kept in f32 inside the kernel.
    x_bf = jax.random.normal(kx4, (16, 8, 16, 16), dtype=jnp.float32).astype(jnp.bfloat16)
    out_bf, mask_bf = drop_path_pallas(x_bf, drop_prob=drop_prob,
                                       training=True, key=kmask4)
    out_bf = jax.block_until_ready(out_bf)
    ref_bf = (x_bf.astype(jnp.float32)
              * (mask_bf / keep_prob).reshape(16, 1, 1, 1)).astype(jnp.bfloat16)
    assert out_bf.dtype == jnp.bfloat16
    assert jnp.allclose(out_bf.astype(jnp.float32), ref_bf.astype(jnp.float32),
                        atol=1e-2, rtol=1e-2)

    # Eval / drop_prob==0 path returns the input unchanged (same (out, mask) arity).
    out_eval, mask_eval = drop_path_pallas(x, drop_prob=drop_prob,
                                           training=False, key=kmask)
    assert jnp.array_equal(out_eval, x)
    assert mask_eval.shape == (N,)

    # drop_prob == 1.0 guard: all-zero output, no NaNs.
    out_all, mask_all = drop_path_pallas(x, drop_prob=1.0, training=True, key=kmask)
    assert jnp.array_equal(out_all, jnp.zeros_like(x))
    assert jnp.array_equal(mask_all, jnp.zeros((N,), dtype=jnp.float32))

    print("KERNEL_OK")
</pallas_src>

<mosaic_0001>
module attributes {stable_mosaic.version = 11 : i64} {
  func.func @_drop_path_kernel(%arg0: i32, %arg1: i32, %arg2: memref<8x1xf32, #tpu.memory_space<vmem>>, %arg3: memref<8x1024xf32, #tpu.memory_space<vmem>>, %arg4: memref<8x1024xf32, #tpu.memory_space<vmem>>) attributes {dimension_semantics = [#tpu.dimension_semantics<parallel>, #tpu.dimension_semantics<parallel>], iteration_bounds = array<i64: 1, 1>, scalar_prefetch = 0 : i64, scratch_operands = 0 : i64, tpu.core_type = #tpu.core_type<tc>, window_params = [{transform_indices = @transform_0, window_bounds = array<i64: 8, 1>}, {transform_indices = @transform_1, window_bounds = array<i64: 8, 1024>}, {transform_indices = @transform_2, window_bounds = array<i64: 8, 1024>}]} {
    %c0 = arith.constant 0 : index
    %c0_0 = arith.constant 0 : index
    %0 = vector.load %arg3[%c0, %c0_0] : memref<8x1024xf32, #tpu.memory_space<vmem>>, vector<8x1024xf32>
    %c0_1 = arith.constant 0 : index
    %c0_2 = arith.constant 0 : index
    %1 = vector.load %arg2[%c0_1, %c0_2] : memref<8x1xf32, #tpu.memory_space<vmem>>, vector<8x1xf32>
    %2 = vector.broadcast %1 : vector<8x1xf32> to vector<8x1024xf32>
    %3 = arith.mulf %0, %2 : vector<8x1024xf32>
    %c0_3 = arith.constant 0 : index
    %c0_4 = arith.constant 0 : index
    %4 = vector.load %arg4[%c0_3, %c0_4] : memref<8x1024xf32, #tpu.memory_space<vmem>>, vector<8x1024xf32>
    tpu.vector_store %arg4[%c0_3, %c0_4], %3 {strides = array<i32>} : memref<8x1024xf32, #tpu.memory_space<vmem>>, vector<8x1024xf32>,
    return
  }
  func.func @transform_0(%arg0: i32, %arg1: i32) -> (i32, i32) {
    %c0_i32 = arith.constant 0 : i32
    %c0_i32_0 = arith.constant 0 : i32
    return %arg0, %c0_i32 : i32, i32
  }
  func.func @transform_1(%arg0: i32, %arg1: i32) -> (i32, i32) {
    %c0_i32 = arith.constant 0 : i32
    return %arg0, %arg1 : i32, i32
  }
  func.func @transform_2(%arg0: i32, %arg1: i32) -> (i32, i32) {
    %c0_i32 = arith.constant 0 : i32
    return %arg0, %arg1 : i32, i32
  }
}

</mosaic_0001>

<llo_original>
// kernel: tpu_custom_call.1
$region0: #{tpu_custom_call.1}
  #allocation0 [shape = 'u32[]', space=smem, size = 0x4, offset = 0x4, fixed_abs, tag = 'smem constant byte address 0x4 - core index']
  #allocation1 [shape = 'u32[144,128]{1,0:T(1,128)}', space=vmem, size = 0x12000, scoped, tag = 'internal scratch']
  %s0 = inlined_call_operand.vmem [shape: f32[2,1], index: 0, kind: input, shape index: {}]
  %s1 = inlined_call_operand.hbm [shape: f32[2,1024], index: 1, kind: input, shape index: {}]
  %s2 = inlined_call_operand.hbm [shape: f32[2,1024], index: 2, kind: output, shape index: {}]
  %s3 = sld [smem:[#allocation0]]
  $region22: #{tpu_custom_call.1} parent=0
    _
  %s5 = ssub.s32 1, %s3
  %s6 = scalar_select 0, %s5, %s3
  $region1: #{tpu_custom_call.1} parent=0
    #allocation2 [shape = 'u8[32768]{0}', space=vmem, size = 0x8000, scoped, tag = 'input window, operand 1, single buffered']
    #allocation3 [shape = 's32[1]{0}', space=sflag, size = 0x4, scoped, tag = 'scoped memory for tpu_custom_call.1']
    #allocation4 [shape = 's32[1]{0}', space=sflag, size = 0x4, scoped, tag = 'scoped memory for tpu_custom_call.1']
    #allocation5 [shape = 'u8[32768]{0}', space=vmem, size = 0x8000, scoped, tag = 'output window, operand 0, single buffered']
    %7 = vsyncpa [#allocation3], 0
    %8 = vsyncpa [#allocation4], 0
    // Predicated region
    $region2: #{tpu_custom_call.1} parent=1 // pred_check
      _
    $region3: #{tpu_custom_call.1} parent=1 // pred_check_branch
      %10 = sbr.rel (0) target = $region5
    $region4: #{tpu_custom_call.1} parent=1 // pred_region
      _
    $region5: #{tpu_custom_call.1} parent=1 // pred_fallthru
      _
    // Predicated region
    $region6: #{tpu_custom_call.1} parent=1 // pred_check
      _
    $region7: #{tpu_custom_call.1} parent=1 // pred_check_branch
      %12 = sbr.rel (0) target = $region9
    $region8: #{tpu_custom_call.1} parent=1 // pred_region
      %s14 = ssub.s32 1024, 256
      %15 = vsyncadd [#allocation3], %s14
      %s16 = sshll.u32 [#allocation2], 4
      %s17 = int_to_ptr.vmem [resolvable:$true] %s16
      %22 = dma.hbm_to_vmem [thread:$0]  %s1, 256, %s17, [#allocation3], 256, 256, 16
    $region9: #{tpu_custom_call.1} parent=1 // pred_fallthru
      _
    // Predicated region
    $region10: #{tpu_custom_call.1} parent=1 // pred_check
      _
    $region11: #{tpu_custom_call.1} parent=1 // pred_check_branch
      %24 = sbr.rel (0) target = $region13
    $region12: #{tpu_custom_call.1} parent=1 // pred_region
      %25 = dma.done [#allocation3], 1024
    $region13: #{tpu_custom_call.1} parent=1 // pred_fallthru
      _
    %v26 = vld [vmem:[#allocation2] sm:$0xff]
    %v27 = vld [vmem:[#allocation2 + $0x8] sm:$0xff]
    %v28 = vld [vmem:[#allocation2 + $0x10] sm:$0xff]
    %v29 = vld [vmem:[#allocation2 + $0x18] sm:$0xff]
    %v30 = vld [vmem:[#allocation2 + $0x20] sm:$0xff]
    %v31 = vld [vmem:[#allocation2 + $0x28] sm:$0xff]
    %v32 = vld [vmem:[#allocation2 + $0x30] sm:$0xff]
    %v33 = vld [vmem:[#allocation2 + $0x38] sm:$0xff]
    %v34 = vld [vmem:[%s0] sm:$0xff]
    %36 = vset.pattern.permute.xlu0 0
    %37 = vperm.xlu0 %36, %v34
    %v38 = vpop.permute.xlu0 %37
    %v40 = vunpack.c.l.s4 269488144
    %v41 = vunpack.c.0.s8 %v40
    %v42 = vlaneseq
    %v43 = vshrl.u32 %v42, 7
    %v44 = vsub.s32 %v41, %v43
    %v45 = vrot.slane %v38, %v44
    %v47 = vunpack.c.l.s4 842150450
    %v48 = vunpack.c.0.s8 %v47
    %v49 = vlaneseq
    %v50 = vshrl.u32 %v49, 7
    %v51 = vsub.s32 %v48, %v50
    %v52 = vrot.slane %v38, %v51
    %v54 = vunpack.c.l.s4 1414812756
    %v55 = vunpack.c.0.s8 %v54
    %v56 = vlaneseq
    %v57 = vshrl.u32 %v56, 7
    %v58 = vsub.s32 %v55, %v57
    %v59 = vrot.slane %v38, %v58
    %v61 = vunpack.c.l.s4 1987475062
    %v62 = vunpack.c.0.s8 %v61
    %v63 = vlaneseq
    %v64 = vshrl.u32 %v63, 7
    %v65 = vsub.s32 %v62, %v64
    %v66 = vrot.slane %v38, %v65
    %v71 = vmul.f32 %v26, %v45
    %v72 = vmul.f32 %v27, %v45
    %v73 = vmul.f32 %v28, %v52
    %v74 = vmul.f32 %v29, %v52
    %v75 = vmul.f32 %v30, %v59
    %v76 = vmul.f32 %v31, %v59
    %v77 = vmul.f32 %v32, %v66
    %v78 = vmul.f32 %v33, %v66
    %79 = vst [vmem:[#allocation5] sm:$0xff] %v71
    %80 = vst [vmem:[#allocation5 + $0x8] sm:$0xff] %v72
    %81 = vst [vmem:[#allocation5 + $0x10] sm:$0xff] %v73
    %82 = vst [vmem:[#allocation5 + $0x18] sm:$0xff] %v74
    %83 = vst [vmem:[#allocation5 + $0x20] sm:$0xff] %v75
    %84 = vst [vmem:[#allocation5 + $0x28] sm:$0xff] %v76
    %85 = vst [vmem:[#allocation5 + $0x30] sm:$0xff] %v77
    %86 = vst [vmem:[#allocation5 + $0x38] sm:$0xff] %v78
    // Predicated region
    $region14: #{tpu_custom_call.1} parent=1 // pred_check
      _
    $region15: #{tpu_custom_call.1} parent=1 // pred_check_branch
      %88 = sbr.rel (0) target = $region17
    $region16: #{tpu_custom_call.1} parent=1 // pred_region
      %s90 = ssub.s32 1024, 256
      %91 = vsyncadd [#allocation4], %s90
      %s92 = sshll.u32 [#allocation5], 4
      %s93 = int_to_ptr.vmem [resolvable:$true] %s92
      %98 = dma.vmem_to_hbm [thread:$0]  %s93, 256, %s2, [#allocation4], 256, 256, 16
    $region17: #{tpu_custom_call.1} parent=1 // pred_fallthru
      _
    // Predicated region
    $region18: #{tpu_custom_call.1} parent=1 // pred_check
      _
    $region19: #{tpu_custom_call.1} parent=1 // pred_check_branch
      %100 = sbr.rel (0) target = $region21
    $region20: #{tpu_custom_call.1} parent=1 // pred_region
      %101 = dma.done [#allocation4], 1024
    $region21: #{tpu_custom_call.1} parent=1 // pred_fallthru
      _
    %102 = vsyncpa [#allocation3], 1
    %103 = vsyncpa [#allocation4], 1

</llo_original>
